<compile_context>
chip_gen: v5e
topology: v5e:2x2
jax: 0.10.0
libtpu: 0.0.40
codegen_flags: <defaults>
</compile_context>

<pallas_src>
import jax
import jax.numpy as jnp
from jax.experimental import pallas as pl
from jax.experimental.pallas import tpu as pltpu

_LANE = 128      # lane width (last dim)
_SUBLANE = 16    # bf16 packs 16 rows per sublane group


def _round_up(x, m):
    return ((x + m - 1) // m) * m


def _default_epilogue_dtype():
    """bf16 epilogue on v6e/v7x (bf16 VALU); f32 on v5e and older."""
    try:
        kind = jax.devices()[0].device_kind.lower()
    except Exception:
        return jnp.float32
    return jnp.bfloat16 if ("v6" in kind or "v7" in kind) else jnp.float32


def _make_kernel(epi_dtype):
    """Full autoencoder forward for one batch tile, entirely in VMEM."""

    def kernel(x_ref, *refs):
        out_ref = refs[-1]
        param_refs = refs[:-1]
        n_layers = len(param_refs) // 2

        # Cast activations to the MXU operand dtype in-kernel (no host pass).
        h = x_ref[...].astype(jnp.bfloat16)
        for l in range(n_layers):
            w_ref, b_ref = param_refs[2 * l], param_refs[2 * l + 1]
            acc = jnp.dot(h, w_ref[...], preferred_element_type=jnp.float32)
            if l < n_layers - 1:
                h = jnp.maximum(acc.astype(epi_dtype) + b_ref[...].astype(epi_dtype), 0)
                h = h.astype(jnp.bfloat16)
            else:
                # Keep the sigmoid path in f32; exp and the approximate
                # reciprocal both use the EUP slot.
                logits = acc + b_ref[...]
                p = pl.reciprocal(1.0 + jnp.exp(-logits), approx=True)
                out_ref[...] = p.astype(out_ref.dtype)

    return kernel


def _choose_batch_tile(B):
    """Balanced, sublane-aligned tiles; >=2 grid steps for v7x megacore."""
    n_steps = max(2, pl.cdiv(B, 512))
    return _round_up(pl.cdiv(B, n_steps), _SUBLANE)


def prepare_params(params):
    """One-time pad (to 128-lane multiples) + cast of the parameters.

    params: list of (W, b) with W of shape (in_features, out_features) — i.e.
    already transposed vs nn.Linear's (out, in) — and b of shape (1, out) or
    (out,). Returns bf16 weights and f32 biases, zero-padded (numerically
    inert: zero weight rows/cols, zero bias, ReLU(0)=0).
    """
    prepared = []
    for (w, b) in params:
        fi, fo = w.shape
        fi_p, fo_p = _round_up(fi, _LANE), _round_up(fo, _LANE)
        w_p = jnp.zeros((fi_p, fo_p), jnp.bfloat16).at[:fi, :fo].set(
            w.astype(jnp.bfloat16))
        b_p = jnp.zeros((1, fo_p), jnp.float32).at[:, :fo].set(
            b.reshape(1, -1).astype(jnp.float32))
        prepared.append((w_p, b_p))
    return prepared


def autoencoder_forward(x, prepared_params, *, batch_tile=None,
                        out_dtype=jnp.bfloat16, epilogue_dtype=None):
    """x: (B, input_dim) float32; prepared_params: output of prepare_params."""
    B, input_dim = x.shape
    in_pad = prepared_params[0][0].shape[0]
    assert in_pad == _round_up(input_dim, _LANE), "params/input_dim mismatch"

    if epilogue_dtype is None:
        epilogue_dtype = _default_epilogue_dtype()
    if batch_tile is None:
        batch_tile = _choose_batch_tile(B)
    assert batch_tile % _SUBLANE == 0, \
        "batch_tile must be a multiple of 16 (bf16 sublane packing)"
    B_pad = _round_up(B, batch_tile)

    # Pad the activation stream only when actually needed; x stays f32 and is
    # cast to bf16 inside the kernel (saves a full HBM round trip vs a host
    # pad+cast pass).
    needs_pad = (B_pad != B) or (in_pad != input_dim)
    if needs_pad:
        x_in = jnp.zeros((B_pad, in_pad), x.dtype).at[:B, :input_dim].set(x)
    else:
        x_in = x

    weight_bytes = sum(int(w.size) * w.dtype.itemsize +
                       int(b.size) * b.dtype.itemsize
                       for (w, b) in prepared_params)
    # Weights/biases have a grid-invariant block index; single-buffer them once
    # they are big enough for double-buffering to matter (keeps the fused,
    # weight-resident design viable under v7x's 64 MiB VMEM at large input_dim).
    single_buffer_weights = weight_bytes > (8 << 20)
    w_mode = pl.Buffered(1) if single_buffer_weights else None

    in_specs = [pl.BlockSpec((batch_tile, in_pad), lambda i: (i, 0))]
    flat_params = []
    for (w_p, b_p) in prepared_params:
        flat_params.extend([w_p, b_p])
        in_specs.append(pl.BlockSpec(w_p.shape, lambda i: (0, 0),
                                     pipeline_mode=w_mode))
        in_specs.append(pl.BlockSpec(b_p.shape, lambda i: (0, 0),
                                     pipeline_mode=w_mode))

    out_spec = pl.BlockSpec((batch_tile, in_pad), lambda i: (i, 0))
    grid = (B_pad // batch_tile,)

    # Scoped-VMEM estimate: double-buffered activation in/out tiles + weights.
    act_bytes = batch_tile * in_pad * (
        x_in.dtype.itemsize + jnp.dtype(out_dtype).itemsize) * 2
    est = act_bytes + weight_bytes * (1 if single_buffer_weights else 2)
    cp_kwargs = dict(dimension_semantics=("parallel",))
    if est > (30 << 20):
        cp_kwargs["vmem_limit_bytes"] = min(int(est * 1.5) + (4 << 20), 64 << 20)

    out = pl.pallas_call(
        _make_kernel(epilogue_dtype),
        out_shape=jax.ShapeDtypeStruct((B_pad, in_pad), out_dtype),
        grid_spec=pl.GridSpec(grid=grid, in_specs=in_specs, out_specs=out_spec),
        compiler_params=pltpu.CompilerParams(**cp_kwargs),
    )(x_in, *flat_params)

    # Drop batch / lane padding only when it exists (padded sigmoid cols = 0.5).
    if needs_pad:
        out = out[:B, :input_dim]
    return out


def init_params(key, input_dim, latent_dim):
    """PyTorch-style init: U(-1/sqrt(fan_in), 1/sqrt(fan_in)).

    Weights stored as (in_features, out_features); biases as (1, out_features).
    """
    hid1_dim = int(input_dim * 0.5)
    hid2_dim = int(hid1_dim * 0.5)
    dims = [input_dim, hid1_dim, hid2_dim, latent_dim,
            hid2_dim, hid1_dim, input_dim]
    params = []
    for i in range(6):
        fan_in, fan_out = dims[i], dims[i + 1]
        key, kw, kb = jax.random.split(key, 3)
        bound = 1.0 / jnp.sqrt(jnp.float32(fan_in))
        w = jax.random.uniform(kw, (fan_in, fan_out), jnp.float32, -bound, bound)
        b = jax.random.uniform(kb, (1, fan_out), jnp.float32, -bound, bound)
        params.append((w, b))
    return params


def autoencoder_ref(x, params):
    """Pure-JAX f32 reference for correctness checking."""
    h = x
    for idx, (w, b) in enumerate(params):
        h = h @ w + b
        h = jax.nn.sigmoid(h) if idx == len(params) - 1 else jnp.maximum(h, 0.0)
    return h


if __name__ == "__main__":
    input_dim = 128
    latent_dim = 16
    batch = 64  # -> batch_tile=32, 2-step parallel grid, no padding / slicing

    key = jax.random.PRNGKey(0)
    kx, kp = jax.random.split(key)
    x = jax.random.uniform(kx, (batch, input_dim), jnp.float32)  # pixels in [0,1)
    params = init_params(kp, input_dim, latent_dim)
    prepared = prepare_params(params)   # one-time pad + bf16 cast

    recon = autoencoder_forward(x, prepared)
    recon = jax.block_until_ready(recon)

    ref = autoencoder_ref(x, params)
    assert recon.shape == (batch, input_dim)
    err = jnp.max(jnp.abs(recon.astype(jnp.float32) - ref))
    # bf16 MXU operands + bf16 output vs f32 reference: loose tolerance
    # (scale it with sqrt(input_dim) if testing image-scale dims).
    assert err < 2.5e-2, f"mismatch vs reference: max abs err = {err}"

    print("KERNEL_OK")
</pallas_src>

<mosaic_0001>
module attributes {stable_mosaic.version = 11 : i64} {
  func.func @kernel(%arg0: i32, %arg1: memref<32x128xf32, #tpu.memory_space<vmem>>, %arg2: memref<128x128xbf16, #tpu.memory_space<vmem>>, %arg3: memref<1x128xf32, #tpu.memory_space<vmem>>, %arg4: memref<128x128xbf16, #tpu.memory_space<vmem>>, %arg5: memref<1x128xf32, #tpu.memory_space<vmem>>, %arg6: memref<128x128xbf16, #tpu.memory_space<vmem>>, %arg7: memref<1x128xf32, #tpu.memory_space<vmem>>, %arg8: memref<128x128xbf16, #tpu.memory_space<vmem>>, %arg9: memref<1x128xf32, #tpu.memory_space<vmem>>, %arg10: memref<128x128xbf16, #tpu.memory_space<vmem>>, %arg11: memref<1x128xf32, #tpu.memory_space<vmem>>, %arg12: memref<128x128xbf16, #tpu.memory_space<vmem>>, %arg13: memref<1x128xf32, #tpu.memory_space<vmem>>, %arg14: memref<32x128xbf16, #tpu.memory_space<vmem>>) attributes {dimension_semantics = [#tpu.dimension_semantics<parallel>], iteration_bounds = array<i64: 2>, scalar_prefetch = 0 : i64, scratch_operands = 0 : i64, tpu.core_type = #tpu.core_type<tc>, window_params = [{transform_indices = @transform_0, window_bounds = array<i64: 32, 128>}, {pipeline_mode = #tpu.pipeline_mode<synchronous>, transform_indices = @transform_1, window_bounds = array<i64: 128, 128>}, {pipeline_mode = #tpu.pipeline_mode<synchronous>, transform_indices = @transform_2, window_bounds = array<i64: 1, 128>}, {pipeline_mode = #tpu.pipeline_mode<synchronous>, transform_indices = @transform_3, window_bounds = array<i64: 128, 128>}, {pipeline_mode = #tpu.pipeline_mode<synchronous>, transform_indices = @transform_4, window_bounds = array<i64: 1, 128>}, {pipeline_mode = #tpu.pipeline_mode<synchronous>, transform_indices = @transform_5, window_bounds = array<i64: 128, 128>}, {pipeline_mode = #tpu.pipeline_mode<synchronous>, transform_indices = @transform_6, window_bounds = array<i64: 1, 128>}, {pipeline_mode = #tpu.pipeline_mode<synchronous>, transform_indices = @transform_7, window_bounds = array<i64: 128, 128>}, {pipeline_mode = #tpu.pipeline_mode<synchronous>, transform_indices = @transform_8, window_bounds = array<i64: 1, 128>}, {pipeline_mode = #tpu.pipeline_mode<synchronous>, transform_indices = @transform_9, window_bounds = array<i64: 128, 128>}, {pipeline_mode = #tpu.pipeline_mode<synchronous>, transform_indices = @transform_10, window_bounds = array<i64: 1, 128>}, {pipeline_mode = #tpu.pipeline_mode<synchronous>, transform_indices = @transform_11, window_bounds = array<i64: 128, 128>}, {pipeline_mode = #tpu.pipeline_mode<synchronous>, transform_indices = @transform_12, window_bounds = array<i64: 1, 128>}, {transform_indices = @transform_13, window_bounds = array<i64: 32, 128>}]} {
    %c0 = arith.constant 0 : index
    %c0_0 = arith.constant 0 : index
    %0 = vector.load %arg1[%c0, %c0_0] : memref<32x128xf32, #tpu.memory_space<vmem>>, vector<32x128xf32>
    %1 = arith.truncf %0 : vector<32x128xf32> to vector<32x128xbf16>
    %c0_1 = arith.constant 0 : index
    %c0_2 = arith.constant 0 : index
    %2 = vector.load %arg2[%c0_1, %c0_2] : memref<128x128xbf16, #tpu.memory_space<vmem>>, vector<128x128xbf16>
    %cst = arith.constant dense<0.000000e+00> : vector<32x128xf32>
    %3 = tpu.matmul %1, %2, %cst {dimension_numbers = #tpu.dot_dimension_numbers<[1], [0], [0], [1], [0, 0, 1, 1], [], []>} : vector<32x128xbf16>, vector<128x128xbf16>, vector<32x128xf32> -> vector<32x128xf32>
    %c0_3 = arith.constant 0 : index
    %c0_4 = arith.constant 0 : index
    %4 = vector.load %arg3[%c0_3, %c0_4] : memref<1x128xf32, #tpu.memory_space<vmem>>, vector<1x128xf32>
    %5 = vector.broadcast %4 : vector<1x128xf32> to vector<32x128xf32>
    %6 = arith.addf %3, %5 : vector<32x128xf32>
    %cst_5 = arith.constant 0.000000e+00 : f32
    %7 = vector.broadcast %cst_5 : f32 to vector<32x128xf32>
    %8 = arith.maximumf %6, %7 : vector<32x128xf32>
    %9 = arith.truncf %8 : vector<32x128xf32> to vector<32x128xbf16>
    %c0_6 = arith.constant 0 : index
    %c0_7 = arith.constant 0 : index
    %10 = vector.load %arg4[%c0_6, %c0_7] : memref<128x128xbf16, #tpu.memory_space<vmem>>, vector<128x128xbf16>
    %cst_8 = arith.constant dense<0.000000e+00> : vector<32x128xf32>
    %11 = tpu.matmul %9, %10, %cst_8 {dimension_numbers = #tpu.dot_dimension_numbers<[1], [0], [0], [1], [0, 0, 1, 1], [], []>} : vector<32x128xbf16>, vector<128x128xbf16>, vector<32x128xf32> -> vector<32x128xf32>
    %c0_9 = arith.constant 0 : index
    %c0_10 = arith.constant 0 : index
    %12 = vector.load %arg5[%c0_9, %c0_10] : memref<1x128xf32, #tpu.memory_space<vmem>>, vector<1x128xf32>
    %13 = vector.broadcast %12 : vector<1x128xf32> to vector<32x128xf32>
    %14 = arith.addf %11, %13 : vector<32x128xf32>
    %cst_11 = arith.constant 0.000000e+00 : f32
    %15 = vector.broadcast %cst_11 : f32 to vector<32x128xf32>
    %16 = arith.maximumf %14, %15 : vector<32x128xf32>
    %17 = arith.truncf %16 : vector<32x128xf32> to vector<32x128xbf16>
    %c0_12 = arith.constant 0 : index
    %c0_13 = arith.constant 0 : index
    %18 = vector.load %arg6[%c0_12, %c0_13] : memref<128x128xbf16, #tpu.memory_space<vmem>>, vector<128x128xbf16>
    %cst_14 = arith.constant dense<0.000000e+00> : vector<32x128xf32>
    %19 = tpu.matmul %17, %18, %cst_14 {dimension_numbers = #tpu.dot_dimension_numbers<[1], [0], [0], [1], [0, 0, 1, 1], [], []>} : vector<32x128xbf16>, vector<128x128xbf16>, vector<32x128xf32> -> vector<32x128xf32>
    %c0_15 = arith.constant 0 : index
    %c0_16 = arith.constant 0 : index
    %20 = vector.load %arg7[%c0_15, %c0_16] : memref<1x128xf32, #tpu.memory_space<vmem>>, vector<1x128xf32>
    %21 = vector.broadcast %20 : vector<1x128xf32> to vector<32x128xf32>
    %22 = arith.addf %19, %21 : vector<32x128xf32>
    %cst_17 = arith.constant 0.000000e+00 : f32
    %23 = vector.broadcast %cst_17 : f32 to vector<32x128xf32>
    %24 = arith.maximumf %22, %23 : vector<32x128xf32>
    %25 = arith.truncf %24 : vector<32x128xf32> to vector<32x128xbf16>
    %c0_18 = arith.constant 0 : index
    %c0_19 = arith.constant 0 : index
    %26 = vector.load %arg8[%c0_18, %c0_19] : memref<128x128xbf16, #tpu.memory_space<vmem>>, vector<128x128xbf16>
    %cst_20 = arith.constant dense<0.000000e+00> : vector<32x128xf32>
    %27 = tpu.matmul %25, %26, %cst_20 {dimension_numbers = #tpu.dot_dimension_numbers<[1], [0], [0], [1], [0, 0, 1, 1], [], []>} : vector<32x128xbf16>, vector<128x128xbf16>, vector<32x128xf32> -> vector<32x128xf32>
    %c0_21 = arith.constant 0 : index
    %c0_22 = arith.constant 0 : index
    %28 = vector.load %arg9[%c0_21, %c0_22] : memref<1x128xf32, #tpu.memory_space<vmem>>, vector<1x128xf32>
    %29 = vector.broadcast %28 : vector<1x128xf32> to vector<32x128xf32>
    %30 = arith.addf %27, %29 : vector<32x128xf32>
    %cst_23 = arith.constant 0.000000e+00 : f32
    %31 = vector.broadcast %cst_23 : f32 to vector<32x128xf32>
    %32 = arith.maximumf %30, %31 : vector<32x128xf32>
    %33 = arith.truncf %32 : vector<32x128xf32> to vector<32x128xbf16>
    %c0_24 = arith.constant 0 : index
    %c0_25 = arith.constant 0 : index
    %34 = vector.load %arg10[%c0_24, %c0_25] : memref<128x128xbf16, #tpu.memory_space<vmem>>, vector<128x128xbf16>
    %cst_26 = arith.constant dense<0.000000e+00> : vector<32x128xf32>
    %35 = tpu.matmul %33, %34, %cst_26 {dimension_numbers = #tpu.dot_dimension_numbers<[1], [0], [0], [1], [0, 0, 1, 1], [], []>} : vector<32x128xbf16>, vector<128x128xbf16>, vector<32x128xf32> -> vector<32x128xf32>
    %c0_27 = arith.constant 0 : index
    %c0_28 = arith.constant 0 : index
    %36 = vector.load %arg11[%c0_27, %c0_28] : memref<1x128xf32, #tpu.memory_space<vmem>>, vector<1x128xf32>
    %37 = vector.broadcast %36 : vector<1x128xf32> to vector<32x128xf32>
    %38 = arith.addf %35, %37 : vector<32x128xf32>
    %cst_29 = arith.constant 0.000000e+00 : f32
    %39 = vector.broadcast %cst_29 : f32 to vector<32x128xf32>
    %40 = arith.maximumf %38, %39 : vector<32x128xf32>
    %41 = arith.truncf %40 : vector<32x128xf32> to vector<32x128xbf16>
    %c0_30 = arith.constant 0 : index
    %c0_31 = arith.constant 0 : index
    %42 = vector.load %arg12[%c0_30, %c0_31] : memref<128x128xbf16, #tpu.memory_space<vmem>>, vector<128x128xbf16>
    %cst_32 = arith.constant dense<0.000000e+00> : vector<32x128xf32>
    %43 = tpu.matmul %41, %42, %cst_32 {dimension_numbers = #tpu.dot_dimension_numbers<[1], [0], [0], [1], [0, 0, 1, 1], [], []>} : vector<32x128xbf16>, vector<128x128xbf16>, vector<32x128xf32> -> vector<32x128xf32>
    %c0_33 = arith.constant 0 : index
    %c0_34 = arith.constant 0 : index
    %44 = vector.load %arg13[%c0_33, %c0_34] : memref<1x128xf32, #tpu.memory_space<vmem>>, vector<1x128xf32>
    %45 = vector.broadcast %44 : vector<1x128xf32> to vector<32x128xf32>
    %46 = arith.addf %43, %45 : vector<32x128xf32>
    %cst_35 = arith.constant 0.000000e+00 : f32
    %47 = vector.broadcast %cst_35 : f32 to vector<32x128xf32>
    %48 = arith.subf %47, %46 : vector<32x128xf32>
    %49 = math.exp %48 : vector<32x128xf32>
    %cst_36 = arith.constant 1.000000e+00 : f32
    %50 = vector.broadcast %cst_36 : f32 to vector<32x128xf32>
    %51 = arith.addf %50, %49 : vector<32x128xf32>
    %52 = tpu.reciprocal %51 {approx = true} : vector<32x128xf32> -> vector<32x128xf32>
    %53 = arith.truncf %52 : vector<32x128xf32> to vector<32x128xbf16>
    %c0_37 = arith.constant 0 : index
    %c0_38 = arith.constant 0 : index
    %54 = vector.load %arg14[%c0_37, %c0_38] : memref<32x128xbf16, #tpu.memory_space<vmem>>, vector<32x128xbf16>
    tpu.vector_store %arg14[%c0_37, %c0_38], %53 {strides = array<i32>} : memref<32x128xbf16, #tpu.memory_space<vmem>>, vector<32x128xbf16>,
    return
  }
  func.func @transform_0(%arg0: i32) -> (i32, i32) {
    %c0_i32 = arith.constant 0 : i32
    %c0_i32_0 = arith.constant 0 : i32
    return %arg0, %c0_i32 : i32, i32
  }
  func.func @transform_1(%arg0: i32) -> (i32, i32) {
    %c0_i32 = arith.constant 0 : i32
    %c0_i32_0 = arith.constant 0 : i32
    %c0_i32_1 = arith.constant 0 : i32
    return %c0_i32, %c0_i32_0 : i32, i32
  }
  func.func @transform_2(%arg0: i32) -> (i32, i32) {
    %c0_i32 = arith.constant 0 : i32
    %c0_i32_0 = arith.constant 0 : i32
    %c0_i32_1 = arith.constant 0 : i32
    return %c0_i32, %c0_i32_0 : i32, i32
  }
  func.func @transform_3(%arg0: i32) -> (i32, i32) {
    %c0_i32 = arith.constant 0 : i32
    %c0_i32_0 = arith.constant 0 : i32
    %c0_i32_1 = arith.constant 0 : i32
    return %c0_i32, %c0_i32_0 : i32, i32
  }
  func.func @transform_4(%arg0: i32) -> (i32, i32) {
    %c0_i32 = arith.constant 0 : i32
    %c0_i32_0 = arith.constant 0 : i32
    %c0_i32_1 = arith.constant 0 : i32
    return %c0_i32, %c0_i32_0 : i32, i32
  }
  func.func @transform_5(%arg0: i32) -> (i32, i32) {
    %c0_i32 = arith.constant 0 : i32
    %c0_i32_0 = arith.constant 0 : i32
    %c0_i32_1 = arith.constant 0 : i32
    return %c0_i32, %c0_i32_0 : i32, i32
  }
  func.func @transform_6(%arg0: i32) -> (i32, i32) {
    %c0_i32 = arith.constant 0 : i32
    %c0_i32_0 = arith.constant 0 : i32
    %c0_i32_1 = arith.constant 0 : i32
    return %c0_i32, %c0_i32_0 : i32, i32
  }
  func.func @transform_7(%arg0: i32) -> (i32, i32) {
    %c0_i32 = arith.constant 0 : i32
    %c0_i32_0 = arith.constant 0 : i32
    %c0_i32_1 = arith.constant 0 : i32
    return %c0_i32, %c0_i32_0 : i32, i32
  }
  func.func @transform_8(%arg0: i32) -> (i32, i32) {
    %c0_i32 = arith.constant 0 : i32
    %c0_i32_0 = arith.constant 0 : i32
    %c0_i32_1 = arith.constant 0 : i32
    return %c0_i32, %c0_i32_0 : i32, i32
  }
  func.func @transform_9(%arg0: i32) -> (i32, i32) {
    %c0_i32 = arith.constant 0 : i32
    %c0_i32_0 = arith.constant 0 : i32
    %c0_i32_1 = arith.constant 0 : i32
    return %c0_i32, %c0_i32_0 : i32, i32
  }
  func.func @transform_10(%arg0: i32) -> (i32, i32) {
    %c0_i32 = arith.constant 0 : i32
    %c0_i32_0 = arith.constant 0 : i32
    %c0_i32_1 = arith.constant 0 : i32
    return %c0_i32, %c0_i32_0 : i32, i32
  }
  func.func @transform_11(%arg0: i32) -> (i32, i32) {
    %c0_i32 = arith.constant 0 : i32
    %c0_i32_0 = arith.constant 0 : i32
    %c0_i32_1 = arith.constant 0 : i32
    return %c0_i32, %c0_i32_0 : i32, i32
  }
  func.func @transform_12(%arg0: i32) -> (i32, i32) {
    %c0_i32 = arith.constant 0 : i32
    %c0_i32_0 = arith.constant 0 : i32
    %c0_i32_1 = arith.constant 0 : i32
    return %c0_i32, %c0_i32_0 : i32, i32
  }
  func.func @transform_13(%arg0: i32) -> (i32, i32) {
    %c0_i32 = arith.constant 0 : i32
    %c0_i32_0 = arith.constant 0 : i32
    return %arg0, %c0_i32 : i32, i32
  }
}

</mosaic_0001>

<llo_original>
// kernel: tpu_custom_call.1
$region0: #{tpu_custom_call.1}
  #allocation0 [shape = 'u32[]', space=smem, size = 0x4, offset = 0x4, fixed_abs, tag = 'smem constant byte address 0x4 - core index']
  #allocation1 [shape = 'u32[72,128]{1,0:T(1,128)}', space=vmem, size = 0x9000, scoped, tag = 'internal scratch']
  %s0 = inlined_call_operand.hbm [shape: f32[64,128], index: 0, kind: input, shape index: {}]
  %s1 = inlined_call_operand.hbm [shape: bf16[128,128], index: 1, kind: input, shape index: {}]
  %s2 = inlined_call_operand.vmem [shape: f32[1,128], index: 2, kind: input, shape index: {}]
  %s3 = inlined_call_operand.hbm [shape: bf16[128,128], index: 3, kind: input, shape index: {}]
  %s4 = inlined_call_operand.vmem [shape: f32[1,128], index: 4, kind: input, shape index: {}]
  %s5 = inlined_call_operand.hbm [shape: bf16[128,128], index: 5, kind: input, shape index: {}]
  %s6 = inlined_call_operand.vmem [shape: f32[1,128], index: 6, kind: input, shape index: {}]
  %s7 = inlined_call_operand.hbm [shape: bf16[128,128], index: 7, kind: input, shape index: {}]
  %s8 = inlined_call_operand.vmem [shape: f32[1,128], index: 8, kind: input, shape index: {}]
  %s9 = inlined_call_operand.hbm [shape: bf16[128,128], index: 9, kind: input, shape index: {}]
  %s10 = inlined_call_operand.vmem [shape: f32[1,128], index: 10, kind: input, shape index: {}]
  %s11 = inlined_call_operand.hbm [shape: bf16[128,128], index: 11, kind: input, shape index: {}]
  %s12 = inlined_call_operand.vmem [shape: f32[1,128], index: 12, kind: input, shape index: {}]
  %s13 = inlined_call_operand.hbm [shape: bf16[64,128], index: 13, kind: output, shape index: {}]
  %s14 = sld [smem:[#allocation0]]
  $region113: #{tpu_custom_call.1} parent=0
    _
  %s16 = ssub.s32 1, %s14
  %s17 = scalar_select 0, %s16, %s14
  $region1: #{tpu_custom_call.1} parent=0
    #allocation2 [shape = 'u8[32768]{0}', space=vmem, size = 0x8000, scoped, tag = 'input window, operand 0']
    #allocation3 [shape = 's32[2]{0}', space=sflag, size = 0x8, scoped, tag = 'scoped memory for tpu_custom_call.1']
    #allocation4 [shape = 's32[2]{0}', space=sflag, size = 0x8, scoped, tag = 'scoped memory for tpu_custom_call.1']
    #allocation5 [shape = 'u8[32768]{0}', space=vmem, size = 0x8000, scoped, tag = 'input window, operand 1, single buffered']
    #allocation6 [shape = 's32[1]{0}', space=sflag, size = 0x4, scoped, tag = 'scoped memory for tpu_custom_call.1']
    #allocation7 [shape = 'u8[32768]{0}', space=vmem, size = 0x8000, scoped, tag = 'input window, operand 3, single buffered']
    #allocation8 [shape = 'u8[32768]{0}', space=vmem, size = 0x8000, scoped, tag = 'input window, operand 5, single buffered']
    #allocation9 [shape = 's32[1]{0}', space=sflag, size = 0x4, scoped, tag = 'scoped memory for tpu_custom_call.1']
    #allocation10 [shape = 'u8[32768]{0}', space=vmem, size = 0x8000, scoped, tag = 'input window, operand 7, single buffered']
    #allocation11 [shape = 'u8[32768]{0}', space=vmem, size = 0x8000, scoped, tag = 'input window, operand 9, single buffered']
    #allocation12 [shape = 's32[1]{0}', space=sflag, size = 0x4, scoped, tag = 'scoped memory for tpu_custom_call.1']
    #allocation13 [shape = 'u8[32768]{0}', space=vmem, size = 0x8000, scoped, tag = 'input window, operand 11, single buffered']
    #allocation14 [shape = 'u8[16384]{0}', space=vmem, size = 0x4000, scoped, tag = 'output window, operand 0']
    %18 = vsyncpa [#allocation3], 0
    %s19 = scalar_lea.sflag [#allocation3], 1
    %20 = vsyncpa %s19, 0
    %21 = vsyncpa [#allocation6], 0
    %22 = vsyncpa [#allocation9], 0
    %23 = vsyncpa [#allocation12], 0
    %24 = vsyncpa [#allocation4], 0
    %s25 = scalar_lea.sflag [#allocation4], 1
    %26 = vsyncpa %s25, 0
    loop: start=0, step=1, limit=4
    $region2: #{tpu_custom_call.1} parent=1 // loop_pre_header
      _
    $region3: #{tpu_custom_call.1} parent=1 // loop_header
      %s28 = sphi 0, %s32
      %p29 = scmp.ge.s32.totalorder %s28, 4
      %s38 = sphi 0, %s40
      %s41 = sphi 0, %s38
      %s42 = sphi 0, %s41
      %s58 = sphi 0, %s42
      %s62 = sphi 0, %s62
      %s64 = sphi 0, %s62
      %s65 = sphi 0, %s64
      %s79 = sphi 0, %s65
      %s83 = sphi 0, %s83
      %s85 = sphi 0, %s83
      %s86 = sphi 0, %s85
      %s100 = sphi 0, %s86
      %s104 = sphi 0, %s104
      %s106 = sphi 0, %s104
      %s107 = sphi 0, %s106
      %s121 = sphi 0, %s107
      %s125 = sphi 0, %s125
      %s127 = sphi 0, %s125
      %s128 = sphi 0, %s127
      %s142 = sphi 0, %s128
      %s146 = sphi 0, %s146
      %s148 = sphi 0, %s146
      %s149 = sphi 0, %s148
      %s163 = sphi 0, %s149
      %s167 = sphi 0, %s167
      %s169 = sphi 0, %s167
      %s170 = sphi 0, %s169
      %s184 = sphi 0, %s170
      %s188 = sphi 0, %s188
      %s190 = sphi 0, %s188
      %s191 = sphi 0, %s190
      %s205 = sphi 0, %s191
      %s209 = sphi 0, %s209
      %s211 = sphi 0, %s209
      %s212 = sphi 0, %s211
      %s226 = sphi 0, %s212
      %s230 = sphi 0, %s230
      %s232 = sphi 0, %s230
      %s233 = sphi 0, %s232
      %s247 = sphi 0, %s233
      %s251 = sphi 0, %s251
      %s253 = sphi 0, %s251
      %s254 = sphi 0, %s253
      %s268 = sphi 0, %s254
      %s272 = sphi 0, %s272
      %s274 = sphi 0, %s272
      %s275 = sphi 0, %s274
      %s289 = sphi 0, %s275
      %s293 = sphi 0, %s293
      %s295 = sphi 0, %s293
      %s296 = sphi 0, %s295
      %s310 = sphi 0, %s296
      %s316 = sphi 0, %s318
      %s319 = sphi 0, %s316
      %s320 = sphi 0, %s319
      %s336 = sphi 0, %s320
    $region4: #{tpu_custom_call.1} parent=1 // loop_header_branch
      %31 = sbr.rel (%p29) target = $region8
    $region5: #{tpu_custom_call.1} parent=1 // loop_body
      %s33 = ssub.s32 %s28, 1
      %s34 = ssub.s32 %s28, 2
      %s35 = sadd.s32 %s28, 1
      %s36 = ssub.s32 %s28, %s35
      %p37 = scmp.eq.s32.totalorder %s36, 0
      %s39 = sadd.s32 %s38, 1
      %s40 = scalar_select %p37, %s38, %s39
      %p43 = pneg %p37
      %p44 = scmp.eq.s32.totalorder %s28, 1
      %p45 = por %p43, %p44
      %p46 = scmp.ne.s32.totalorder %s38, %s41
      %p47 = scmp.eq.s32.totalorder %s28, 0
      %p48 = por %p46, %p47
      %p49 = scmp.ne.s32.totalorder %s38, %s41
      %p50 = scmp.eq.s32.totalorder %s33, 1
      %p51 = por %p49, %p50
      %p52 = scmp.ne.s32.totalorder %s41, %s42
      %p53 = scmp.eq.s32.totalorder %s33, 0
      %p54 = por %p52, %p53
      %p55 = scmp.ne.s32.totalorder %s41, %s42
      %p56 = scmp.eq.s32.totalorder %s34, 1
      %p57 = por %p55, %p56
      %p59 = scmp.ne.s32.totalorder %s42, %s58
      %p60 = scmp.eq.s32.totalorder %s34, 0
      %p61 = por %p59, %p60
      %s63 = sadd.s32 %s62, 1
      %p66 = scmp.eq.s32.totalorder %s28, 1
      %p67 = scmp.ne.s32.totalorder %s62, %s64
      %p68 = scmp.eq.s32.totalorder %s28, 0
      %p69 = por %p67, %p68
      %p70 = scmp.ne.s32.totalorder %s62, %s64
      %p71 = scmp.eq.s32.totalorder %s33, 1
      %p72 = por %p70, %p71
      %p73 = scmp.ne.s32.totalorder %s64, %s65
      %p74 = scmp.eq.s32.totalorder %s33, 0
      %p75 = por %p73, %p74
      %p76 = scmp.ne.s32.totalorder %s64, %s65
      %p77 = scmp.eq.s32.totalorder %s34, 1
      %p78 = por %p76, %p77
      %p80 = scmp.ne.s32.totalorder %s65, %s79
      %p81 = scmp.eq.s32.totalorder %s34, 0
      %p82 = por %p80, %p81
      %s84 = sadd.s32 %s83, 1
      %p87 = scmp.eq.s32.totalorder %s28, 1
      %p88 = scmp.ne.s32.totalorder %s83, %s85
      %p89 = scmp.eq.s32.totalorder %s28, 0
      %p90 = por %p88, %p89
      %p91 = scmp.ne.s32.totalorder %s83, %s85
      %p92 = scmp.eq.s32.totalorder %s33, 1
      %p93 = por %p91, %p92
      %p94 = scmp.ne.s32.totalorder %s85, %s86
      %p95 = scmp.eq.s32.totalorder %s33, 0
      %p96 = por %p94, %p95
      %p97 = scmp.ne.s32.totalorder %s85, %s86
      %p98 = scmp.eq.s32.totalorder %s34, 1
      %p99 = por %p97, %p98
      %p101 = scmp.ne.s32.totalorder %s86, %s100
      %p102 = scmp.eq.s32.totalorder %s34, 0
      %p103 = por %p101, %p102
      %s105 = sadd.s32 %s104, 1
      %p108 = scmp.eq.s32.totalorder %s28, 1
      %p109 = scmp.ne.s32.totalorder %s104, %s106
      %p110 = scmp.eq.s32.totalorder %s28, 0
      %p111 = por %p109, %p110
      %p112 = scmp.ne.s32.totalorder %s104, %s106
      %p113 = scmp.eq.s32.totalorder %s33, 1
      %p114 = por %p112, %p113
      %p115 = scmp.ne.s32.totalorder %s106, %s107
      %p116 = scmp.eq.s32.totalorder %s33, 0
      %p117 = por %p115, %p116
      %p118 = scmp.ne.s32.totalorder %s106, %s107
      %p119 = scmp.eq.s32.totalorder %s34, 1
      %p120 = por %p118, %p119
      %p122 = scmp.ne.s32.totalorder %s107, %s121
      %p123 = scmp.eq.s32.totalorder %s34, 0
      %p124 = por %p122, %p123
      %s126 = sadd.s32 %s125, 1
      %p129 = scmp.eq.s32.totalorder %s28, 1
      %p130 = scmp.ne.s32.totalorder %s125, %s127
      %p131 = scmp.eq.s32.totalorder %s28, 0
      %p132 = por %p130, %p131
      %p133 = scmp.ne.s32.totalorder %s125, %s127
      %p134 = scmp.eq.s32.totalorder %s33, 1
      %p135 = por %p133, %p134
      %p136 = scmp.ne.s32.totalorder %s127, %s128
      %p137 = scmp.eq.s32.totalorder %s33, 0
      %p138 = por %p136, %p137
      %p139 = scmp.ne.s32.totalorder %s127, %s128
      %p140 = scmp.eq.s32.totalorder %s34, 1
      %p141 = por %p139, %p140
      %p143 = scmp.ne.s32.totalorder %s128, %s142
      %p144 = scmp.eq.s32.totalorder %s34, 0
      %p145 = por %p143, %p144
      %s147 = sadd.s32 %s146, 1
      %p150 = scmp.eq.s32.totalorder %s28, 1
      %p151 = scmp.ne.s32.totalorder %s146, %s148
      %p152 = scmp.eq.s32.totalorder %s28, 0
      %p153 = por %p151, %p152
      %p154 = scmp.ne.s32.totalorder %s146, %s148
      %p155 = scmp.eq.s32.totalorder %s33, 1
      %p156 = por %p154, %p155
      %p157 = scmp.ne.s32.totalorder %s148, %s149
      %p158 = scmp.eq.s32.totalorder %s33, 0
      %p159 = por %p157, %p158
      %p160 = scmp.ne.s32.totalorder %s148, %s149
      %p161 = scmp.eq.s32.totalorder %s34, 1
      %p162 = por %p160, %p161
      %p164 = scmp.ne.s32.totalorder %s149, %s163
      %p165 = scmp.eq.s32.totalorder %s34, 0
      %p166 = por %p164, %p165
      %s168 = sadd.s32 %s167, 1
      %p171 = scmp.eq.s32.totalorder %s28, 1
      %p172 = scmp.ne.s32.totalorder %s167, %s169
      %p173 = scmp.eq.s32.totalorder %s28, 0
      %p174 = por %p172, %p173
      %p175 = scmp.ne.s32.totalorder %s167, %s169
      %p176 = scmp.eq.s32.totalorder %s33, 1
      %p177 = por %p175, %p176
      %p178 = scmp.ne.s32.totalorder %s169, %s170
      %p179 = scmp.eq.s32.totalorder %s33, 0
      %p180 = por %p178, %p179
      %p181 = scmp.ne.s32.totalorder %s169, %s170
      %p182 = scmp.eq.s32.totalorder %s34, 1
      %p183 = por %p181, %p182
      %p185 = scmp.ne.s32.totalorder %s170, %s184
      %p186 = scmp.eq.s32.totalorder %s34, 0
      %p187 = por %p185, %p186
      %s189 = sadd.s32 %s188, 1
      %p192 = scmp.eq.s32.totalorder %s28, 1
      %p193 = scmp.ne.s32.totalorder %s188, %s190
      %p194 = scmp.eq.s32.totalorder %s28, 0
      %p195 = por %p193, %p194
      %p196 = scmp.ne.s32.totalorder %s188, %s190
      %p197 = scmp.eq.s32.totalorder %s33, 1
      %p198 = por %p196, %p197
      %p199 = scmp.ne.s32.totalorder %s190, %s191
      %p200 = scmp.eq.s32.totalorder %s33, 0
      %p201 = por %p199, %p200
      %p202 = scmp.ne.s32.totalorder %s190, %s191
      %p203 = scmp.eq.s32.totalorder %s34, 1
      %p204 = por %p202, %p203
      %p206 = scmp.ne.s32.totalorder %s191, %s205
      %p207 = scmp.eq.s32.totalorder %s34, 0
      %p208 = por %p206, %p207
      %s210 = sadd.s32 %s209, 1
      %p213 = scmp.eq.s32.totalorder %s28, 1
      %p214 = scmp.ne.s32.totalorder %s209, %s211
      %p215 = scmp.eq.s32.totalorder %s28, 0
      %p216 = por %p214, %p215
      %p217 = scmp.ne.s32.totalorder %s209, %s211
      %p218 = scmp.eq.s32.totalorder %s33, 1
      %p219 = por %p217, %p218
      %p220 = scmp.ne.s32.totalorder %s211, %s212
      %p221 = scmp.eq.s32.totalorder %s33, 0
      %p222 = por %p220, %p221
      %p223 = scmp.ne.s32.totalorder %s211, %s212
      %p224 = scmp.eq.s32.totalorder %s34, 1
      %p225 = por %p223, %p224
      %p227 = scmp.ne.s32.totalorder %s212, %s226
      %p228 = scmp.eq.s32.totalorder %s34, 0
      %p229 = por %p227, %p228
      %s231 = sadd.s32 %s230, 1
      %p234 = scmp.eq.s32.totalorder %s28, 1
      %p235 = scmp.ne.s32.totalorder %s230, %s232
      %p236 = scmp.eq.s32.totalorder %s28, 0
      %p237 = por %p235, %p236
      %p238 = scmp.ne.s32.totalorder %s230, %s232
      %p239 = scmp.eq.s32.totalorder %s33, 1
      %p240 = por %p238, %p239
      %p241 = scmp.ne.s32.totalorder %s232, %s233
      %p242 = scmp.eq.s32.totalorder %s33, 0
      %p243 = por %p241, %p242
      %p244 = scmp.ne.s32.totalorder %s232, %s233
      %p245 = scmp.eq.s32.totalorder %s34, 1
      %p246 = por %p244, %p245
      %p248 = scmp.ne.s32.totalorder %s233, %s247
      %p249 = scmp.eq.s32.totalorder %s34, 0
      %p250 = por %p248, %p249
      %s252 = sadd.s32 %s251, 1
      %p255 = scmp.eq.s32.totalorder %s28, 1
      %p256 = scmp.ne.s32.totalorder %s251, %s253
      %p257 = scmp.eq.s32.totalorder %s28, 0
      %p258 = por %p256, %p257
      %p259 = scmp.ne.s32.totalorder %s251, %s253
      %p260 = scmp.eq.s32.totalorder %s33, 1
      %p261 = por %p259, %p260
      %p262 = scmp.ne.s32.totalorder %s253, %s254
      %p263 = scmp.eq.s32.totalorder %s33, 0
      %p264 = por %p262, %p263
      %p265 = scmp.ne.s32.totalorder %s253, %s254
      %p266 = scmp.eq.s32.totalorder %s34, 1
      %p267 = por %p265, %p266
      %p269 = scmp.ne.s32.totalorder %s254, %s268
      %p270 = scmp.eq.s32.totalorder %s34, 0
      %p271 = por %p269, %p270
      %s273 = sadd.s32 %s272, 1
      %p276 = scmp.eq.s32.totalorder %s28, 1
      %p277 = scmp.ne.s32.totalorder %s272, %s274
      %p278 = scmp.eq.s32.totalorder %s28, 0
      %p279 = por %p277, %p278
      %p280 = scmp.ne.s32.totalorder %s272, %s274
      %p281 = scmp.eq.s32.totalorder %s33, 1
      %p282 = por %p280, %p281
      %p283 = scmp.ne.s32.totalorder %s274, %s275
      %p284 = scmp.eq.s32.totalorder %s33, 0
      %p285 = por %p283, %p284
      %p286 = scmp.ne.s32.totalorder %s274, %s275
      %p287 = scmp.eq.s32.totalorder %s34, 1
      %p288 = por %p286, %p287
      %p290 = scmp.ne.s32.totalorder %s275, %s289
      %p291 = scmp.eq.s32.totalorder %s34, 0
      %p292 = por %p290, %p291
      %s294 = sadd.s32 %s293, 1
      %p297 = scmp.eq.s32.totalorder %s28, 1
      %p298 = scmp.ne.s32.totalorder %s293, %s295
      %p299 = scmp.eq.s32.totalorder %s28, 0
      %p300 = por %p298, %p299
      %p301 = scmp.ne.s32.totalorder %s293, %s295
      %p302 = scmp.eq.s32.totalorder %s33, 1
      %p303 = por %p301, %p302
      %p304 = scmp.ne.s32.totalorder %s295, %s296
      %p305 = scmp.eq.s32.totalorder %s33, 0
      %p306 = por %p304, %p305
      %p307 = scmp.ne.s32.totalorder %s295, %s296
      %p308 = scmp.eq.s32.totalorder %s34, 1
      %p309 = por %p307, %p308
      %p311 = scmp.ne.s32.totalorder %s296, %s310
      %p312 = scmp.eq.s32.totalorder %s34, 0
      %p313 = por %p311, %p312
      %s314 = ssub.s32 %s28, %s35
      %p315 = scmp.eq.s32.totalorder %s314, 0
      %s317 = sadd.s32 %s316, 1
      %s318 = scalar_select %p315, %s316, %s317
      %p321 = pneg %p315
      %p322 = scmp.eq.s32.totalorder %s28, 1
      %p323 = por %p321, %p322
      %p324 = scmp.ne.s32.totalorder %s316, %s319
      %p325 = scmp.eq.s32.totalorder %s28, 0
      %p326 = por %p324, %p325
      %p327 = scmp.ne.s32.totalorder %s316, %s319
      %p328 = scmp.eq.s32.totalorder %s33, 1
      %p329 = por %p327, %p328
      %p330 = scmp.ne.s32.totalorder %s319, %s320
      %p331 = scmp.eq.s32.totalorder %s33, 0
      %p332 = por %p330, %p331
      %p333 = scmp.ne.s32.totalorder %s319, %s320
      %p334 = scmp.eq.s32.totalorder %s34, 1
      %p335 = por %p333, %p334
      %p337 = scmp.ne.s32.totalorder %s320, %s336
      %p338 = scmp.eq.s32.totalorder %s34, 0
      %p339 = por %p337, %p338
      %p340 = scmp.le.s32.totalorder 1, %s28
      %p341 = scmp.lt.s32.totalorder %s28, 3
      %p342 = pnand %p340, %p341
      %p343 = pneg %p342
      // Predicated region
      $region9: #{tpu_custom_call.1} parent=5 // pred_check
        _
      $region10: #{tpu_custom_call.1} parent=5 // pred_check_branch
        %345 = sbr.rel (%p342) target = $region12
      $region11: #{tpu_custom_call.1} parent=5 // pred_region
        %s346 = ssub.s32 %s28, 1
        // Predicated region
        $region13: #{tpu_custom_call.1} parent=11 // pred_check
          %p347 = pneg %p75
        $region14: #{tpu_custom_call.1} parent=11 // pred_check_branch
          %349 = sbr.rel (%p347) target = $region16
        $region15: #{tpu_custom_call.1} parent=11 // pred_region
          %351 = vsyncadd [#allocation6], 0
          %s352 = sshll.u32 %s1, 4
          %s353 = int_to_ptr.hbm [resolvable:$true] %s352
          %s354 = sshll.u32 [#allocation5], 4
          %s355 = int_to_ptr.vmem [resolvable:$true] %s354
          %360 = dma.hbm_to_vmem [thread:$0]  %s353, 1024, %s355, [#allocation6], 64, 64, 4
        $region16: #{tpu_custom_call.1} parent=11 // pred_fallthru
          _
        // Predicated region
        $region17: #{tpu_custom_call.1} parent=11 // pred_check
          %p361 = pneg %p96
        $region18: #{tpu_custom_call.1} parent=11 // pred_check_branch
          %363 = sbr.rel (%p361) target = $region20
        $region19: #{tpu_custom_call.1} parent=11 // pred_region
          _
        $region20: #{tpu_custom_call.1} parent=11 // pred_fallthru
          _
        // Predicated region
        $region21: #{tpu_custom_call.1} parent=11 // pred_check
          %p364 = pneg %p117
        $region22: #{tpu_custom_call.1} parent=11 // pred_check_branch
          %366 = sbr.rel (%p364) target = $region24
        $region23: #{tpu_custom_call.1} parent=11 // pred_region
          %368 = vsyncadd [#allocation6], 0
          %s369 = sshll.u32 %s3, 4
          %s370 = int_to_ptr.hbm [resolvable:$true] %s369
          %s371 = sshll.u32 [#allocation7], 4
          %s372 = int_to_ptr.vmem [resolvable:$true] %s371
          %377 = dma.hbm_to_vmem [thread:$0]  %s370, 1024, %s372, [#allocation6], 64, 64, 4
        $region24: #{tpu_custom_call.1} parent=11 // pred_fallthru
          _
        // Predicated region
        $region25: #{tpu_custom_call.1} parent=11 // pred_check
          %p378 = pneg %p138
        $region26: #{tpu_custom_call.1} parent=11 // pred_check_branch
          %380 = sbr.rel (%p378) target = $region28
        $region27: #{tpu_custom_call.1} parent=11 // pred_region
          _
        $region28: #{tpu_custom_call.1} parent=11 // pred_fallthru
          _
        // Predicated region
        $region29: #{tpu_custom_call.1} parent=11 // pred_check
          %p381 = pneg %p159
        $region30: #{tpu_custom_call.1} parent=11 // pred_check_branch
          %383 = sbr.rel (%p381) target = $region32
        $region31: #{tpu_custom_call.1} parent=11 // pred_region
          %385 = vsyncadd [#allocation9], 0
          %s386 = sshll.u32 %s5, 4
          %s387 = int_to_ptr.hbm [resolvable:$true] %s386
          %s388 = sshll.u32 [#allocation8], 4
          %s389 = int_to_ptr.vmem [resolvable:$true] %s388
          %394 = dma.hbm_to_vmem [thread:$0]  %s387, 1024, %s389, [#allocation9], 64, 64, 4
        $region32: #{tpu_custom_call.1} parent=11 // pred_fallthru
          _
        // Predicated region
        $region33: #{tpu_custom_call.1} parent=11 // pred_check
          %p395 = pneg %p180
        $region34: #{tpu_custom_call.1} parent=11 // pred_check_branch
          %397 = sbr.rel (%p395) target = $region36
        $region35: #{tpu_custom_call.1} parent=11 // pred_region
          _
        $region36: #{tpu_custom_call.1} parent=11 // pred_fallthru
          _
        // Predicated region
        $region37: #{tpu_custom_call.1} parent=11 // pred_check
          %p398 = pneg %p201
        $region38: #{tpu_custom_call.1} parent=11 // pred_check_branch
          %400 = sbr.rel (%p398) target = $region40
        $region39: #{tpu_custom_call.1} parent=11 // pred_region
          %402 = vsyncadd [#allocation9], 0
          %s403 = sshll.u32 %s7, 4
          %s404 = int_to_ptr.hbm [resolvable:$true] %s403
          %s405 = sshll.u32 [#allocation10], 4
          %s406 = int_to_ptr.vmem [resolvable:$true] %s405
          %411 = dma.hbm_to_vmem [thread:$0]  %s404, 1024, %s406, [#allocation9], 64, 64, 4
        $region40: #{tpu_custom_call.1} parent=11 // pred_fallthru
          _
        // Predicated region
        $region41: #{tpu_custom_call.1} parent=11 // pred_check
          %p412 = pneg %p222
        $region42: #{tpu_custom_call.1} parent=11 // pred_check_branch
          %414 = sbr.rel (%p412) target = $region44
        $region43: #{tpu_custom_call.1} parent=11 // pred_region
          _
        $region44: #{tpu_custom_call.1} parent=11 // pred_fallthru
          _
        // Predicated region
        $region45: #{tpu_custom_call.1} parent=11 // pred_check
          %p415 = pneg %p243
        $region46: #{tpu_custom_call.1} parent=11 // pred_check_branch
          %417 = sbr.rel (%p415) target = $region48
        $region47: #{tpu_custom_call.1} parent=11 // pred_region
          %419 = vsyncadd [#allocation12], 0
          %s420 = sshll.u32 %s9, 4
          %s421 = int_to_ptr.hbm [resolvable:$true] %s420
          %s422 = sshll.u32 [#allocation11], 4
          %s423 = int_to_ptr.vmem [resolvable:$true] %s422
          %428 = dma.hbm_to_vmem [thread:$0]  %s421, 1024, %s423, [#allocation12], 64, 64, 4
        $region48: #{tpu_custom_call.1} parent=11 // pred_fallthru
          _
        // Predicated region
        $region49: #{tpu_custom_call.1} parent=11 // pred_check
          %p429 = pneg %p264
        $region50: #{tpu_custom_call.1} parent=11 // pred_check_branch
          %431 = sbr.rel (%p429) target = $region52
        $region51: #{tpu_custom_call.1} parent=11 // pred_region
          _
        $region52: #{tpu_custom_call.1} parent=11 // pred_fallthru
          _
        // Predicated region
        $region53: #{tpu_custom_call.1} parent=11 // pred_check
          %p432 = pneg %p285
        $region54: #{tpu_custom_call.1} parent=11 // pred_check_branch
          %434 = sbr.rel (%p432) target = $region56
        $region55: #{tpu_custom_call.1} parent=11 // pred_region
          %436 = vsyncadd [#allocation12], 0
          %s437 = sshll.u32 %s11, 4
          %s438 = int_to_ptr.hbm [resolvable:$true] %s437
          %s439 = sshll.u32 [#allocation13], 4
          %s440 = int_to_ptr.vmem [resolvable:$true] %s439
          %445 = dma.hbm_to_vmem [thread:$0]  %s438, 1024, %s440, [#allocation12], 64, 64, 4
        $region56: #{tpu_custom_call.1} parent=11 // pred_fallthru
          _
        // Predicated region
        $region57: #{tpu_custom_call.1} parent=11 // pred_check
          %p446 = pneg %p306
        $region58: #{tpu_custom_call.1} parent=11 // pred_check_branch
          %448 = sbr.rel (%p446) target = $region60
        $region59: #{tpu_custom_call.1} parent=11 // pred_region
          _
        $region60: #{tpu_custom_call.1} parent=11 // pred_fallthru
          _
      $region12: #{tpu_custom_call.1} parent=5 // pred_fallthru
        _
      %p449 = scmp.lt.s32.totalorder %s28, 2
      // Predicated region
      $region61: #{tpu_custom_call.1} parent=5 // pred_check
        %p450 = pneg %p449
      $region62: #{tpu_custom_call.1} parent=5 // pred_check_branch
        %452 = sbr.rel (%p450) target = $region64
      $region63: #{tpu_custom_call.1} parent=5 // pred_region
        // Predicated region
        $region65: #{tpu_custom_call.1} parent=63 // pred_check
          %p453 = pneg %p48
        $region66: #{tpu_custom_call.1} parent=63 // pred_check_branch
          %455 = sbr.rel (%p453) target = $region68
        $region67: #{tpu_custom_call.1} parent=63 // pred_region
          %s456 = sand.u32 %s38, 1
          %s457 = scalar_lea.sflag [#allocation3], %s456
          %s458 = sand.u32 %s38, 1
          %s459 = smul.addr %s458, 32
          %s460 = scalar_lea.vmem [#allocation2], %s459
          %s461 = smul.u32 4, %s28
          %463 = vsyncadd %s457, 0
          %s464 = smul.addr %s461, 8
          %s465 = scalar_lea.hbm %s0, %s464
          %s466 = sshll.u32 %s465, 4
          %s467 = int_to_ptr.hbm [resolvable:$true] %s466
          %s468 = sshll.u32 %s460, 4
          %s469 = int_to_ptr.vmem [resolvable:$true] %s468
          %474 = dma.hbm_to_vmem [thread:$0]  %s467, 512, %s469, %s457, 128, 128, 8
        $region68: #{tpu_custom_call.1} parent=63 // pred_fallthru
          _
      $region64: #{tpu_custom_call.1} parent=5 // pred_fallthru
        _
      %p475 = scmp.le.s32.totalorder 1, %s28
      %p476 = scmp.lt.s32.totalorder %s28, 3
      %p477 = pnand %p475, %p476
      %p478 = pneg %p477
      // Predicated region
      $region69: #{tpu_custom_call.1} parent=5 // pred_check
        _
      $region70: #{tpu_custom_call.1} parent=5 // pred_check_branch
        %480 = sbr.rel (%p477) target = $region72
      $region71: #{tpu_custom_call.1} parent=5 // pred_region
        %s481 = ssub.s32 %s28, 1
        %s482 = sand.u32 %s41, 1
        %s483 = scalar_lea.sflag [#allocation3], %s482
        %s484 = sand.u32 %s41, 1
        %s485 = smul.addr %s484, 32
        %s486 = scalar_lea.vmem [#allocation2], %s485
        // Predicated region
        $region73: #{tpu_custom_call.1} parent=71 // pred_check
          %p487 = pneg %p54
        $region74: #{tpu_custom_call.1} parent=71 // pred_check_branch
          %489 = sbr.rel (%p487) target = $region76
        $region75: #{tpu_custom_call.1} parent=71 // pred_region
          %491 = dma.done %s483, 512
        $region76: #{tpu_custom_call.1} parent=71 // pred_fallthru
          _
        // Predicated region
        $region77: #{tpu_custom_call.1} parent=71 // pred_check
          %p492 = pneg %p75
        $region78: #{tpu_custom_call.1} parent=71 // pred_check_branch
          %494 = sbr.rel (%p492) target = $region80
        $region79: #{tpu_custom_call.1} parent=71 // pred_region
          %496 = dma.done [#allocation6], 1024
        $region80: #{tpu_custom_call.1} parent=71 // pred_fallthru
          _
        // Predicated region
        $region81: #{tpu_custom_call.1} parent=71 // pred_check
          %p497 = pneg %p117
        $region82: #{tpu_custom_call.1} parent=71 // pred_check_branch
          %499 = sbr.rel (%p497) target = $region84
        $region83: #{tpu_custom_call.1} parent=71 // pred_region
          %501 = dma.done [#allocation6], 1024
        $region84: #{tpu_custom_call.1} parent=71 // pred_fallthru
          _
        // Predicated region
        $region85: #{tpu_custom_call.1} parent=71 // pred_check
          %p502 = pneg %p159
        $region86: #{tpu_custom_call.1} parent=71 // pred_check_branch
          %504 = sbr.rel (%p502) target = $region88
        $region87: #{tpu_custom_call.1} parent=71 // pred_region
          %506 = dma.done [#allocation9], 1024
        $region88: #{tpu_custom_call.1} parent=71 // pred_fallthru
          _
        // Predicated region
        $region89: #{tpu_custom_call.1} parent=71 // pred_check
          %p507 = pneg %p201
        $region90: #{tpu_custom_call.1} parent=71 // pred_check_branch
          %509 = sbr.rel (%p507) target = $region92
        $region91: #{tpu_custom_call.1} parent=71 // pred_region
          %511 = dma.done [#allocation9], 1024
        $region92: #{tpu_custom_call.1} parent=71 // pred_fallthru
          _
        // Predicated region
        $region93: #{tpu_custom_call.1} parent=71 // pred_check
          %p512 = pneg %p243
        $region94: #{tpu_custom_call.1} parent=71 // pred_check_branch
          %514 = sbr.rel (%p512) target = $region96
        $region95: #{tpu_custom_call.1} parent=71 // pred_region
          %516 = dma.done [#allocation12], 1024
        $region96: #{tpu_custom_call.1} parent=71 // pred_fallthru
          _
        // Predicated region
        $region97: #{tpu_custom_call.1} parent=71 // pred_check
          %p517 = pneg %p285
        $region98: #{tpu_custom_call.1} parent=71 // pred_check_branch
          %519 = sbr.rel (%p517) target = $region100
        $region99: #{tpu_custom_call.1} parent=71 // pred_region
          %521 = dma.done [#allocation12], 1024
        $region100: #{tpu_custom_call.1} parent=71 // pred_fallthru
          _
        %s522 = sand.u32 %s41, 1
        %s523 = scalar_lea.sflag [#allocation3], %s522
        %s524 = sand.u32 %s41, 1
        %s525 = smul.addr %s524, 32
        %s526 = scalar_lea.vmem [#allocation2], %s525
        %p527 = pneg %p54
        %p528 = pneg %p51
        %p529 = pneg %p75
        %p530 = pneg %p72
        %p531 = pneg %p96
        %p532 = pneg %p93
        %p533 = pneg %p117
        %p534 = pneg %p114
        %p535 = pneg %p138
        %p536 = pneg %p135
        %p537 = pneg %p159
        %p538 = pneg %p156
        %p539 = pneg %p180
        %p540 = pneg %p177
        %p541 = pneg %p201
        %p542 = pneg %p198
        %p543 = pneg %p222
        %p544 = pneg %p219
        %p545 = pneg %p243
        %p546 = pneg %p240
        %p547 = pneg %p264
        %p548 = pneg %p261
        %p549 = pneg %p285
        %p550 = pneg %p282
        %p551 = pneg %p306
        %p552 = pneg %p303
        %p553 = pneg %p332
        %p554 = pneg %p329
        %s555 = sand.u32 %s319, 1
        %s556 = scalar_lea.sflag [#allocation4], %s555
        %s557 = sand.u32 %s319, 1
        %s558 = smul.addr %s557, 16
        %s559 = scalar_lea.vmem [#allocation14], %s558
        %s560 = smul.u32 4, %s33
        %s561 = smul.u32 4, %s33
        %v562 = vld [vmem:[%s486] sm:$0xff]
        %v563 = vld [vmem:[%s486 + $0x8] sm:$0xff]
        %v564 = vld [vmem:[%s486 + $0x10] sm:$0xff]
        %v565 = vld [vmem:[%s486 + $0x18] sm:$0xff]
        %v566 = vpack.c.bf16 %v563, %v562
        %v567 = vpack.c.bf16 %v565, %v564
        %v568 = vld [vmem:[#allocation5] sm:$0xf]
        %v569 = vld [vmem:[#allocation5 + $0x4] sm:$0xf]
        %v570 = vld [vmem:[#allocation5 + $0x8] sm:$0xf]
        %v571 = vld [vmem:[#allocation5 + $0xc] sm:$0xf]
        %v572 = vld [vmem:[#allocation5 + $0x10] sm:$0xf]
        %v573 = vld [vmem:[#allocation5 + $0x14] sm:$0xf]
        %v574 = vld [vmem:[#allocation5 + $0x18] sm:$0xf]
        %v575 = vld [vmem:[#allocation5 + $0x1c] sm:$0xf]
        %v576 = vld [vmem:[#allocation5 + $0x20] sm:$0xf]
        %v577 = vld [vmem:[#allocation5 + $0x24] sm:$0xf]
        %v578 = vld [vmem:[#allocation5 + $0x28] sm:$0xf]
        %v579 = vld [vmem:[#allocation5 + $0x2c] sm:$0xf]
        %v580 = vld [vmem:[#allocation5 + $0x30] sm:$0xf]
        %v581 = vld [vmem:[#allocation5 + $0x34] sm:$0xf]
        %v582 = vld [vmem:[#allocation5 + $0x38] sm:$0xf]
        %v583 = vld [vmem:[#allocation5 + $0x3c] sm:$0xf]
        %v584 = vld [vmem:[%s2] sm:$0x1]
        %v586 = vperm.slane %v584, 0
        %v604 = vunpack.c.l.b16 %v568
        %v605 = vunpack.c.l.b16 %v569
        %v606 = vunpack.c.l.b16 %v570
        %v607 = vunpack.c.l.b16 %v571
        %v608 = vunpack.c.l.b16 %v572
        %v609 = vunpack.c.l.b16 %v573
        %v610 = vunpack.c.l.b16 %v574
        %v611 = vunpack.c.l.b16 %v575
        %v612 = vunpack.c.l.b16 %v576
        %v613 = vunpack.c.l.b16 %v577
        %v614 = vunpack.c.l.b16 %v578
        %v615 = vunpack.c.l.b16 %v579
        %v616 = vunpack.c.l.b16 %v580
        %v617 = vunpack.c.l.b16 %v581
        %v618 = vunpack.c.l.b16 %v582
        %v619 = vunpack.c.l.b16 %v583
        %v620 = vpack.c.b16 %v605, %v604
        %v621 = vpack.c.b16 %v607, %v606
        %v622 = vpack.c.b16 %v609, %v608
        %v623 = vpack.c.b16 %v611, %v610
        %v624 = vpack.c.b16 %v613, %v612
        %v625 = vpack.c.b16 %v615, %v614
        %v626 = vpack.c.b16 %v617, %v616
        %v627 = vpack.c.b16 %v619, %v618
        %636 = vmatpush.bf16.msra.mxu0 %v627
        %637 = vmatpush.bf16.msra.mxu0 %v626
        %638 = vmatpush.bf16.msra.mxu0 %v625
        %639 = vmatpush.bf16.msra.mxu0 %v624
        %640 = vmatpush.bf16.msra.mxu0 %v623
        %641 = vmatpush.bf16.msra.mxu0 %v622
        %642 = vmatpush.bf16.msra.mxu0 %v621
        %643 = vmatpush.bf16.msra.mxu0 %v620
        %644 = vmatmul.bf16.gmra.mxu0 %v566
        %v645 = vpop.f32.mrf.mxu0
        %v646 = vadd.f32 %v586, %v645
        %v647 = vpop.f32.mrf.mxu0
        %v648 = vadd.f32 %v586, %v647
        %649 = vmatmul.bf16.gmra.mxu0 %v567
        %v650 = vpop.f32.mrf.mxu0
        %v651 = vadd.f32 %v586, %v650
        %v652 = vpop.f32.mrf.mxu0
        %v653 = vadd.f32 %v586, %v652
        %654 = vdwg.mxu0
        %v655 = vmax.f32 %v646, 0.0
        %v656 = vmax.f32 %v648, 0.0
        %v657 = vmax.f32 %v651, 0.0
        %v658 = vmax.f32 %v653, 0.0
        %v659 = vpack.c.bf16 %v656, %v655
        %v660 = vpack.c.bf16 %v658, %v657
        %v661 = vld [vmem:[#allocation7] sm:$0xf]
        %v662 = vld [vmem:[#allocation7 + $0x4] sm:$0xf]
        %v663 = vld [vmem:[#allocation7 + $0x8] sm:$0xf]
        %v664 = vld [vmem:[#allocation7 + $0xc] sm:$0xf]
        %v665 = vld [vmem:[#allocation7 + $0x10] sm:$0xf]
        %v666 = vld [vmem:[#allocation7 + $0x14] sm:$0xf]
        %v667 = vld [vmem:[#allocation7 + $0x18] sm:$0xf]
        %v668 = vld [vmem:[#allocation7 + $0x1c] sm:$0xf]
        %v669 = vld [vmem:[#allocation7 + $0x20] sm:$0xf]
        %v670 = vld [vmem:[#allocation7 + $0x24] sm:$0xf]
        %v671 = vld [vmem:[#allocation7 + $0x28] sm:$0xf]
        %v672 = vld [vmem:[#allocation7 + $0x2c] sm:$0xf]
        %v673 = vld [vmem:[#allocation7 + $0x30] sm:$0xf]
        %v674 = vld [vmem:[#allocation7 + $0x34] sm:$0xf]
        %v675 = vld [vmem:[#allocation7 + $0x38] sm:$0xf]
        %v676 = vld [vmem:[#allocation7 + $0x3c] sm:$0xf]
        %v677 = vld [vmem:[%s4] sm:$0x1]
        %v679 = vperm.slane %v677, 0
        %v697 = vunpack.c.l.b16 %v661
        %v698 = vunpack.c.l.b16 %v662
        %v699 = vunpack.c.l.b16 %v663
        %v700 = vunpack.c.l.b16 %v664
        %v701 = vunpack.c.l.b16 %v665
        %v702 = vunpack.c.l.b16 %v666
        %v703 = vunpack.c.l.b16 %v667
        %v704 = vunpack.c.l.b16 %v668
        %v705 = vunpack.c.l.b16 %v669
        %v706 = vunpack.c.l.b16 %v670
        %v707 = vunpack.c.l.b16 %v671
        %v708 = vunpack.c.l.b16 %v672
        %v709 = vunpack.c.l.b16 %v673
        %v710 = vunpack.c.l.b16 %v674
        %v711 = vunpack.c.l.b16 %v675
        %v712 = vunpack.c.l.b16 %v676
        %v713 = vpack.c.b16 %v698, %v697
        %v714 = vpack.c.b16 %v700, %v699
        %v715 = vpack.c.b16 %v702, %v701
        %v716 = vpack.c.b16 %v704, %v703
        %v717 = vpack.c.b16 %v706, %v705
        %v718 = vpack.c.b16 %v708, %v707
        %v719 = vpack.c.b16 %v710, %v709
        %v720 = vpack.c.b16 %v712, %v711
        %729 = vmatpush.bf16.msra.mxu0 %v720
        %730 = vmatpush.bf16.msra.mxu0 %v719
        %731 = vmatpush.bf16.msra.mxu0 %v718
        %732 = vmatpush.bf16.msra.mxu0 %v717
        %733 = vmatpush.bf16.msra.mxu0 %v716
        %734 = vmatpush.bf16.msra.mxu0 %v715
        %735 = vmatpush.bf16.msra.mxu0 %v714
        %736 = vmatpush.bf16.msra.mxu0 %v713
        %737 = vmatmul.bf16.gmra.mxu0 %v659
        %v738 = vpop.f32.mrf.mxu0
        %v739 = vadd.f32 %v679, %v738
        %v740 = vpop.f32.mrf.mxu0
        %v741 = vadd.f32 %v679, %v740
        %742 = vmatmul.bf16.gmra.mxu0 %v660
        %v743 = vpop.f32.mrf.mxu0
        %v744 = vadd.f32 %v679, %v743
        %v745 = vpop.f32.mrf.mxu0
        %v746 = vadd.f32 %v679, %v745
        %747 = vdwg.mxu0
        %v748 = vmax.f32 %v739, 0.0
        %v749 = vmax.f32 %v741, 0.0
        %v750 = vmax.f32 %v744, 0.0
        %v751 = vmax.f32 %v746, 0.0
        %v752 = vpack.c.bf16 %v749, %v748
        %v753 = vpack.c.bf16 %v751, %v750
        %v754 = vld [vmem:[#allocation8] sm:$0xf]
        %v755 = vld [vmem:[#allocation8 + $0x4] sm:$0xf]
        %v756 = vld [vmem:[#allocation8 + $0x8] sm:$0xf]
        %v757 = vld [vmem:[#allocation8 + $0xc] sm:$0xf]
        %v758 = vld [vmem:[#allocation8 + $0x10] sm:$0xf]
        %v759 = vld [vmem:[#allocation8 + $0x14] sm:$0xf]
        %v760 = vld [vmem:[#allocation8 + $0x18] sm:$0xf]
        %v761 = vld [vmem:[#allocation8 + $0x1c] sm:$0xf]
        %v762 = vld [vmem:[#allocation8 + $0x20] sm:$0xf]
        %v763 = vld [vmem:[#allocation8 + $0x24] sm:$0xf]
        %v764 = vld [vmem:[#allocation8 + $0x28] sm:$0xf]
        %v765 = vld [vmem:[#allocation8 + $0x2c] sm:$0xf]
        %v766 = vld [vmem:[#allocation8 + $0x30] sm:$0xf]
        %v767 = vld [vmem:[#allocation8 + $0x34] sm:$0xf]
        %v768 = vld [vmem:[#allocation8 + $0x38] sm:$0xf]
        %v769 = vld [vmem:[#allocation8 + $0x3c] sm:$0xf]
        %v770 = vld [vmem:[%s6] sm:$0x1]
        %v772 = vperm.slane %v770, 0
        %v790 = vunpack.c.l.b16 %v754
        %v791 = vunpack.c.l.b16 %v755
        %v792 = vunpack.c.l.b16 %v756
        %v793 = vunpack.c.l.b16 %v757
        %v794 = vunpack.c.l.b16 %v758
        %v795 = vunpack.c.l.b16 %v759
        %v796 = vunpack.c.l.b16 %v760
        %v797 = vunpack.c.l.b16 %v761
        %v798 = vunpack.c.l.b16 %v762
        %v799 = vunpack.c.l.b16 %v763
        %v800 = vunpack.c.l.b16 %v764
        %v801 = vunpack.c.l.b16 %v765
        %v802 = vunpack.c.l.b16 %v766
        %v803 = vunpack.c.l.b16 %v767
        %v804 = vunpack.c.l.b16 %v768
        %v805 = vunpack.c.l.b16 %v769
        %v806 = vpack.c.b16 %v791, %v790
        %v807 = vpack.c.b16 %v793, %v792
        %v808 = vpack.c.b16 %v795, %v794
        %v809 = vpack.c.b16 %v797, %v796
        %v810 = vpack.c.b16 %v799, %v798
        %v811 = vpack.c.b16 %v801, %v800
        %v812 = vpack.c.b16 %v803, %v802
        %v813 = vpack.c.b16 %v805, %v804
        %822 = vmatpush.bf16.msra.mxu0 %v813
        %823 = vmatpush.bf16.msra.mxu0 %v812
        %824 = vmatpush.bf16.msra.mxu0 %v811
        %825 = vmatpush.bf16.msra.mxu0 %v810
        %826 = vmatpush.bf16.msra.mxu0 %v809
        %827 = vmatpush.bf16.msra.mxu0 %v808
        %828 = vmatpush.bf16.msra.mxu0 %v807
        %829 = vmatpush.bf16.msra.mxu0 %v806
        %830 = vmatmul.bf16.gmra.mxu0 %v752
        %v831 = vpop.f32.mrf.mxu0
        %v832 = vadd.f32 %v772, %v831
        %v833 = vpop.f32.mrf.mxu0
        %v834 = vadd.f32 %v772, %v833
        %835 = vmatmul.bf16.gmra.mxu0 %v753
        %v836 = vpop.f32.mrf.mxu0
        %v837 = vadd.f32 %v772, %v836
        %v838 = vpop.f32.mrf.mxu0
        %v839 = vadd.f32 %v772, %v838
        %840 = vdwg.mxu0
        %v841 = vmax.f32 %v832, 0.0
        %v842 = vmax.f32 %v834, 0.0
        %v843 = vmax.f32 %v837, 0.0
        %v844 = vmax.f32 %v839, 0.0
        %v845 = vpack.c.bf16 %v842, %v841
        %v846 = vpack.c.bf16 %v844, %v843
        %v847 = vld [vmem:[#allocation10] sm:$0xf]
        %v848 = vld [vmem:[#allocation10 + $0x4] sm:$0xf]
        %v849 = vld [vmem:[#allocation10 + $0x8] sm:$0xf]
        %v850 = vld [vmem:[#allocation10 + $0xc] sm:$0xf]
        %v851 = vld [vmem:[#allocation10 + $0x10] sm:$0xf]
        %v852 = vld [vmem:[#allocation10 + $0x14] sm:$0xf]
        %v853 = vld [vmem:[#allocation10 + $0x18] sm:$0xf]
        %v854 = vld [vmem:[#allocation10 + $0x1c] sm:$0xf]
        %v855 = vld [vmem:[#allocation10 + $0x20] sm:$0xf]
        %v856 = vld [vmem:[#allocation10 + $0x24] sm:$0xf]
        %v857 = vld [vmem:[#allocation10 + $0x28] sm:$0xf]
        %v858 = vld [vmem:[#allocation10 + $0x2c] sm:$0xf]
        %v859 = vld [vmem:[#allocation10 + $0x30] sm:$0xf]
        %v860 = vld [vmem:[#allocation10 + $0x34] sm:$0xf]
        %v861 = vld [vmem:[#allocation10 + $0x38] sm:$0xf]
        %v862 = vld [vmem:[#allocation10 + $0x3c] sm:$0xf]
        %v863 = vld [vmem:[%s8] sm:$0x1]
        %v865 = vperm.slane %v863, 0
        %v883 = vunpack.c.l.b16 %v847
        %v884 = vunpack.c.l.b16 %v848
        %v885 = vunpack.c.l.b16 %v849
        %v886 = vunpack.c.l.b16 %v850
        %v887 = vunpack.c.l.b16 %v851
        %v888 = vunpack.c.l.b16 %v852
        %v889 = vunpack.c.l.b16 %v853
        %v890 = vunpack.c.l.b16 %v854
        %v891 = vunpack.c.l.b16 %v855
        %v892 = vunpack.c.l.b16 %v856
        %v893 = vunpack.c.l.b16 %v857
        %v894 = vunpack.c.l.b16 %v858
        %v895 = vunpack.c.l.b16 %v859
        %v896 = vunpack.c.l.b16 %v860
        %v897 = vunpack.c.l.b16 %v861
        %v898 = vunpack.c.l.b16 %v862
        %v899 = vpack.c.b16 %v884, %v883
        %v900 = vpack.c.b16 %v886, %v885
        %v901 = vpack.c.b16 %v888, %v887
        %v902 = vpack.c.b16 %v890, %v889
        %v903 = vpack.c.b16 %v892, %v891
        %v904 = vpack.c.b16 %v894, %v893
        %v905 = vpack.c.b16 %v896, %v895
        %v906 = vpack.c.b16 %v898, %v897
        %915 = vmatpush.bf16.msra.mxu0 %v906
        %916 = vmatpush.bf16.msra.mxu0 %v905
        %917 = vmatpush.bf16.msra.mxu0 %v904
        %918 = vmatpush.bf16.msra.mxu0 %v903
        %919 = vmatpush.bf16.msra.mxu0 %v902
        %920 = vmatpush.bf16.msra.mxu0 %v901
        %921 = vmatpush.bf16.msra.mxu0 %v900
        %922 = vmatpush.bf16.msra.mxu0 %v899
        %923 = vmatmul.bf16.gmra.mxu0 %v845
        %v924 = vpop.f32.mrf.mxu0
        %v925 = vadd.f32 %v865, %v924
        %v926 = vpop.f32.mrf.mxu0
        %v927 = vadd.f32 %v865, %v926
        %928 = vmatmul.bf16.gmra.mxu0 %v846
        %v929 = vpop.f32.mrf.mxu0
        %v930 = vadd.f32 %v865, %v929
        %v931 = vpop.f32.mrf.mxu0
        %v932 = vadd.f32 %v865, %v931
        %933 = vdwg.mxu0
        %v934 = vmax.f32 %v925, 0.0
        %v935 = vmax.f32 %v927, 0.0
        %v936 = vmax.f32 %v930, 0.0
        %v937 = vmax.f32 %v932, 0.0
        %v938 = vpack.c.bf16 %v935, %v934
        %v939 = vpack.c.bf16 %v937, %v936
        %v940 = vld [vmem:[#allocation11] sm:$0xf]
        %v941 = vld [vmem:[#allocation11 + $0x4] sm:$0xf]
        %v942 = vld [vmem:[#allocation11 + $0x8] sm:$0xf]
        %v943 = vld [vmem:[#allocation11 + $0xc] sm:$0xf]
        %v944 = vld [vmem:[#allocation11 + $0x10] sm:$0xf]
        %v945 = vld [vmem:[#allocation11 + $0x14] sm:$0xf]
        %v946 = vld [vmem:[#allocation11 + $0x18] sm:$0xf]
        %v947 = vld [vmem:[#allocation11 + $0x1c] sm:$0xf]
        %v948 = vld [vmem:[#allocation11 + $0x20] sm:$0xf]
        %v949 = vld [vmem:[#allocation11 + $0x24] sm:$0xf]
        %v950 = vld [vmem:[#allocation11 + $0x28] sm:$0xf]
        %v951 = vld [vmem:[#allocation11 + $0x2c] sm:$0xf]
        %v952 = vld [vmem:[#allocation11 + $0x30] sm:$0xf]
        %v953 = vld [vmem:[#allocation11 + $0x34] sm:$0xf]
        %v954 = vld [vmem:[#allocation11 + $0x38] sm:$0xf]
        %v955 = vld [vmem:[#allocation11 + $0x3c] sm:$0xf]
        %v956 = vld [vmem:[%s10] sm:$0x1]
        %v958 = vperm.slane %v956, 0
        %v976 = vunpack.c.l.b16 %v940
        %v977 = vunpack.c.l.b16 %v941
        %v978 = vunpack.c.l.b16 %v942
        %v979 = vunpack.c.l.b16 %v943
        %v980 = vunpack.c.l.b16 %v944
        %v981 = vunpack.c.l.b16 %v945
        %v982 = vunpack.c.l.b16 %v946
        %v983 = vunpack.c.l.b16 %v947
        %v984 = vunpack.c.l.b16 %v948
        %v985 = vunpack.c.l.b16 %v949
        %v986 = vunpack.c.l.b16 %v950
        %v987 = vunpack.c.l.b16 %v951
        %v988 = vunpack.c.l.b16 %v952
        %v989 = vunpack.c.l.b16 %v953
        %v990 = vunpack.c.l.b16 %v954
        %v991 = vunpack.c.l.b16 %v955
        %v992 = vpack.c.b16 %v977, %v976
        %v993 = vpack.c.b16 %v979, %v978
        %v994 = vpack.c.b16 %v981, %v980
        %v995 = vpack.c.b16 %v983, %v982
        %v996 = vpack.c.b16 %v985, %v984
        %v997 = vpack.c.b16 %v987, %v986
        %v998 = vpack.c.b16 %v989, %v988
        %v999 = vpack.c.b16 %v991, %v990
        %1008 = vmatpush.bf16.msra.mxu0 %v999
        %1009 = vmatpush.bf16.msra.mxu0 %v998
        %1010 = vmatpush.bf16.msra.mxu0 %v997
        %1011 = vmatpush.bf16.msra.mxu0 %v996
        %1012 = vmatpush.bf16.msra.mxu0 %v995
        %1013 = vmatpush.bf16.msra.mxu0 %v994
        %1014 = vmatpush.bf16.msra.mxu0 %v993
        %1015 = vmatpush.bf16.msra.mxu0 %v992
        %1016 = vmatmul.bf16.gmra.mxu0 %v938
        %v1017 = vpop.f32.mrf.mxu0
        %v1018 = vadd.f32 %v958, %v1017
        %v1019 = vpop.f32.mrf.mxu0
        %v1020 = vadd.f32 %v958, %v1019
        %1021 = vmatmul.bf16.gmra.mxu0 %v939
        %v1022 = vpop.f32.mrf.mxu0
        %v1023 = vadd.f32 %v958, %v1022
        %v1024 = vpop.f32.mrf.mxu0
        %v1025 = vadd.f32 %v958, %v1024
        %1026 = vdwg.mxu0
        %v1027 = vmax.f32 %v1018, 0.0
        %v1028 = vmax.f32 %v1020, 0.0
        %v1029 = vmax.f32 %v1023, 0.0
        %v1030 = vmax.f32 %v1025, 0.0
        %v1031 = vpack.c.bf16 %v1028, %v1027
        %v1032 = vpack.c.bf16 %v1030, %v1029
        %v1033 = vld [vmem:[#allocation13] sm:$0xf]
        %v1034 = vld [vmem:[#allocation13 + $0x4] sm:$0xf]
        %v1035 = vld [vmem:[#allocation13 + $0x8] sm:$0xf]
        %v1036 = vld [vmem:[#allocation13 + $0xc] sm:$0xf]
        %v1037 = vld [vmem:[#allocation13 + $0x10] sm:$0xf]
        %v1038 = vld [vmem:[#allocation13 + $0x14] sm:$0xf]
        %v1039 = vld [vmem:[#allocation13 + $0x18] sm:$0xf]
        %v1040 = vld [vmem:[#allocation13 + $0x1c] sm:$0xf]
        %v1041 = vld [vmem:[#allocation13 + $0x20] sm:$0xf]
        %v1042 = vld [vmem:[#allocation13 + $0x24] sm:$0xf]
        %v1043 = vld [vmem:[#allocation13 + $0x28] sm:$0xf]
        %v1044 = vld [vmem:[#allocation13 + $0x2c] sm:$0xf]
        %v1045 = vld [vmem:[#allocation13 + $0x30] sm:$0xf]
        %v1046 = vld [vmem:[#allocation13 + $0x34] sm:$0xf]
        %v1047 = vld [vmem:[#allocation13 + $0x38] sm:$0xf]
        %v1048 = vld [vmem:[#allocation13 + $0x3c] sm:$0xf]
        %v1049 = vld [vmem:[%s12] sm:$0x1]
        %v1051 = vperm.slane %v1049, 0
        %v1069 = vunpack.c.l.b16 %v1033
        %v1070 = vunpack.c.l.b16 %v1034
        %v1071 = vunpack.c.l.b16 %v1035
        %v1072 = vunpack.c.l.b16 %v1036
        %v1073 = vunpack.c.l.b16 %v1037
        %v1074 = vunpack.c.l.b16 %v1038
        %v1075 = vunpack.c.l.b16 %v1039
        %v1076 = vunpack.c.l.b16 %v1040
        %v1077 = vunpack.c.l.b16 %v1041
        %v1078 = vunpack.c.l.b16 %v1042
        %v1079 = vunpack.c.l.b16 %v1043
        %v1080 = vunpack.c.l.b16 %v1044
        %v1081 = vunpack.c.l.b16 %v1045
        %v1082 = vunpack.c.l.b16 %v1046
        %v1083 = vunpack.c.l.b16 %v1047
        %v1084 = vunpack.c.l.b16 %v1048
        %v1085 = vpack.c.b16 %v1070, %v1069
        %v1086 = vpack.c.b16 %v1072, %v1071
        %v1087 = vpack.c.b16 %v1074, %v1073
        %v1088 = vpack.c.b16 %v1076, %v1075
        %v1089 = vpack.c.b16 %v1078, %v1077
        %v1090 = vpack.c.b16 %v1080, %v1079
        %v1091 = vpack.c.b16 %v1082, %v1081
        %v1092 = vpack.c.b16 %v1084, %v1083
        %1101 = vmatpush.bf16.msra.mxu0 %v1092
        %1102 = vmatpush.bf16.msra.mxu0 %v1091
        %1103 = vmatpush.bf16.msra.mxu0 %v1090
        %1104 = vmatpush.bf16.msra.mxu0 %v1089
        %1105 = vmatpush.bf16.msra.mxu0 %v1088
        %1106 = vmatpush.bf16.msra.mxu0 %v1087
        %1107 = vmatpush.bf16.msra.mxu0 %v1086
        %1108 = vmatpush.bf16.msra.mxu0 %v1085
        %1109 = vmatmul.bf16.gmra.mxu0 %v1031
        %v1110 = vpop.f32.mrf.mxu0
        %v1111 = vadd.f32 %v1051, %v1110
        %v1112 = vpop.f32.mrf.mxu0
        %v1113 = vadd.f32 %v1051, %v1112
        %1114 = vmatmul.bf16.gmra.mxu0 %v1032
        %v1115 = vpop.f32.mrf.mxu0
        %v1116 = vadd.f32 %v1051, %v1115
        %v1117 = vpop.f32.mrf.mxu0
        %v1118 = vadd.f32 %v1051, %v1117
        %1119 = vdwg.mxu0
        %v1120 = vsub.f32 0.0, %v1111
        %v1121 = vsub.f32 0.0, %v1113
        %v1122 = vsub.f32 0.0, %v1116
        %v1123 = vsub.f32 0.0, %v1118
        %v1124 = vmul.f32 %v1120, 1.442695
        %v1125 = vpow.pop %v1124
        %v1126 = vmul.f32 %v1121, 1.442695
        %v1127 = vpow.pop %v1126
        %v1128 = vmul.f32 %v1122, 1.442695
        %v1129 = vpow.pop %v1128
        %v1130 = vmul.f32 %v1123, 1.442695
        %v1131 = vpow.pop %v1130
        %v1132 = vadd.f32 %v1125, 1.0
        %v1133 = vadd.f32 %v1127, 1.0
        %v1134 = vadd.f32 %v1129, 1.0
        %v1135 = vadd.f32 %v1131, 1.0
        %v1136 = vrcp.pop %v1132
        %v1137 = vrcp.pop %v1133
        %v1138 = vrcp.pop %v1134
        %v1139 = vrcp.pop %v1135
        %v1140 = vpack.c.bf16 %v1136, %v1136
        %v1141 = vpack.c.bf16 %v1137, %v1137
        %v1142 = vpack.c.bf16 %v1138, %v1138
        %v1143 = vpack.c.bf16 %v1139, %v1139
        %1144 = vst [vmem:[%s559] sm:$0xf] %v1140
        %1145 = vst [vmem:[%s559 + $0x4] sm:$0xf] %v1141
        %1146 = vst [vmem:[%s559 + $0x8] sm:$0xf] %v1142
        %1147 = vst [vmem:[%s559 + $0xc] sm:$0xf] %v1143
        %s1148 = sand.u32 %s319, 1
        %s1149 = scalar_lea.sflag [#allocation4], %s1148
        %s1150 = sand.u32 %s319, 1
        %s1151 = smul.addr %s1150, 16
        %s1152 = scalar_lea.vmem [#allocation14], %s1151
        // Predicated region
        $region101: #{tpu_custom_call.1} parent=71 // pred_check
          %p1153 = pneg %p329
        $region102: #{tpu_custom_call.1} parent=71 // pred_check_branch
          %1155 = sbr.rel (%p1153) target = $region104
        $region103: #{tpu_custom_call.1} parent=71 // pred_region
          %s1156 = smul.u32 4, %s33
          %1158 = vsyncadd %s1149, 0
          %s1159 = smul.addr %s1156, 4
          %s1160 = scalar_lea.hbm %s13, %s1159
          %s1161 = sshll.u32 %s1152, 4
          %s1162 = int_to_ptr.vmem [resolvable:$true] %s1161
          %s1163 = sshll.u32 %s1160, 4
          %s1164 = int_to_ptr.hbm [resolvable:$true] %s1163
          %1169 = dma.vmem_to_hbm [thread:$0]  %s1162, 256, %s1164, %s1149, 64, 64, 4
        $region104: #{tpu_custom_call.1} parent=71 // pred_fallthru
          _
      $region72: #{tpu_custom_call.1} parent=5 // pred_fallthru
        _
      %p1170 = scmp.le.s32.totalorder 2, %s28
      // Predicated region
      $region105: #{tpu_custom_call.1} parent=5 // pred_check
        %p1171 = pneg %p1170
      $region106: #{tpu_custom_call.1} parent=5 // pred_check_branch
        %1173 = sbr.rel (%p1171) target = $region108
      $region107: #{tpu_custom_call.1} parent=5 // pred_region
        %s1174 = ssub.s32 %s28, 2
        // Predicated region
        $region109: #{tpu_custom_call.1} parent=107 // pred_check
          %p1175 = pneg %p335
        $region110: #{tpu_custom_call.1} parent=107 // pred_check_branch
          %1177 = sbr.rel (%p1175) target = $region112
        $region111: #{tpu_custom_call.1} parent=107 // pred_region
          %s1178 = sand.u32 %s320, 1
          %s1179 = scalar_lea.sflag [#allocation4], %s1178
          %s1180 = sand.u32 %s320, 1
          %s1181 = smul.addr %s1180, 16
          %s1182 = scalar_lea.vmem [#allocation14], %s1181
          %1184 = dma.done %s1179, 256
        $region112: #{tpu_custom_call.1} parent=107 // pred_fallthru
          _
      $region108: #{tpu_custom_call.1} parent=5 // pred_fallthru
        _
    $region6: #{tpu_custom_call.1} parent=1 // loop_footer
      %s32 = sadd.s32 1, %s28
    $region7: #{tpu_custom_call.1} parent=1 // loop_footer_branch
      %27 = sbr.rel target = $region3
    $region8: #{tpu_custom_call.1} parent=1 // loop_exit
      _
    %1185 = vsyncpa [#allocation3], 1
    %s1186 = scalar_lea.sflag [#allocation3], 1
    %1187 = vsyncpa %s1186, 1
    %1188 = vsyncpa [#allocation6], 1
    %1189 = vsyncpa [#allocation9], 1
    %1190 = vsyncpa [#allocation12], 1
    %1191 = vsyncpa [#allocation4], 1
    %s1192 = scalar_lea.sflag [#allocation4], 1
    %1193 = vsyncpa %s1192, 1

</llo_original>
